<compile_context>
chip_gen: v5e
topology: v5e:2x2
jax: 0.10.0
libtpu: 0.0.40
codegen_flags: <defaults>
</compile_context>

<pallas_src>
import jax
import jax.numpy as jnp
from jax.experimental import pallas as pl
from jax.experimental.pallas import tpu as pltpu

_LANE = 128      # lane width: last-dim padding target
_SUBLANE = 8     # f32 sublane granularity: batch-tile padding target


def _round_up(n, m):
    return ((n + m - 1) // m) * m


def _leaky_relu(x, negative_slope=0.01):
    # torch.nn.LeakyReLU default negative_slope = 0.01
    return jnp.maximum(x, negative_slope * x)


def thrower_kernel(x_ref,
                   we_ref, be_ref,
                   w1_ref, b1_ref,
                   w2_ref, b2_ref,
                   wd_ref, bd_ref,
                   out_ref):
    cdt = we_ref.dtype          # matmul operand dtype (f32 or bf16)
    x = x_ref[...].astype(cdt)

    # embed + LeakyReLU  (f32 accumulation, f32 bias/activation math)
    h = jnp.dot(x, we_ref[...], preferred_element_type=jnp.float32) + be_ref[...]
    h = _leaky_relu(h)

    # hidden1 + LeakyReLU
    h1 = jnp.dot(h.astype(cdt), w1_ref[...],
                 preferred_element_type=jnp.float32) + b1_ref[...]
    h1 = _leaky_relu(h1)

    # hidden2 + LeakyReLU
    h2 = jnp.dot(h1.astype(cdt), w2_ref[...],
                 preferred_element_type=jnp.float32) + b2_ref[...]
    h2 = _leaky_relu(h2)

    # direction head (no activation)
    d = jnp.dot(h2.astype(cdt), wd_ref[...],
                preferred_element_type=jnp.float32) + bd_ref[...]
    out_ref[...] = d.astype(out_ref.dtype)


def thrower_forward(x, params, *, tb=512, compute_dtype=jnp.float32):
    """x: [B, input_dim] float32. params: dict of transposed weights ([in, out])
    and biases ([1, out]). Returns [B, output_dim] float32."""
    B, in_dim = x.shape
    hidden_dim = params["we"].shape[1]
    out_dim = params["wd"].shape[1]

    # Lane-dense padding of feature dims (zero padding is a numerical identity).
    in_p = _round_up(in_dim, _LANE)
    h_p = _round_up(hidden_dim, _LANE)
    out_p = _round_up(out_dim, _LANE)

    # Batch tile: multiple of 8 rows, no larger than the (padded) batch needs.
    tb = max(_SUBLANE, _round_up(tb, _SUBLANE))
    tb = min(tb, _round_up(B, _SUBLANE))
    b_p = _round_up(B, tb)

    def pad2(a, rows, cols, dtype):
        return jnp.pad(a, ((0, rows - a.shape[0]),
                           (0, cols - a.shape[1]))).astype(dtype)

    xp = pad2(x, b_p, in_p, jnp.float32)
    we = pad2(params["we"], in_p, h_p, compute_dtype)
    w1 = pad2(params["w1"], h_p, h_p, compute_dtype)
    w2 = pad2(params["w2"], h_p, h_p, compute_dtype)
    wd = pad2(params["wd"], h_p, out_p, compute_dtype)
    be = pad2(params["be"], 1, h_p, jnp.float32)
    b1 = pad2(params["b1"], 1, h_p, jnp.float32)
    b2 = pad2(params["b2"], 1, h_p, jnp.float32)
    bd = pad2(params["bd"], 1, out_p, jnp.float32)

    grid = (b_p // tb,)

    # Whole-array blocks with constant index maps -> weights stay VMEM-resident
    # across all grid iterations (fetched once).
    const = lambda a: pl.BlockSpec(a.shape, lambda i: (0, 0))

    operands = (xp, we, be, w1, b1, w2, b2, wd, bd)

    # Advisory cost estimate for XLA scheduling around the custom call.
    flops = 2 * b_p * (in_p * h_p + 2 * h_p * h_p + h_p * out_p)
    bytes_accessed = (sum(a.size * a.dtype.itemsize for a in operands)
                      + b_p * out_p * 4)

    # Explicit VMEM budget: resident weights + double-buffered x/out tiles +
    # f32 intermediate activations, with 2x headroom, clamped to v7x's 64 MiB.
    weight_bytes = sum(a.size * a.dtype.itemsize for a in operands[1:])
    io_bytes = 2 * (tb * in_p * 4 + tb * out_p * 4)        # double-buffered tiles
    act_bytes = 4 * tb * h_p * 4                           # f32 intermediates
    vmem_limit = int(min(max(2 * (weight_bytes + io_bytes + act_bytes),
                             16 * 1024 * 1024),
                         64 * 1024 * 1024))

    out = pl.pallas_call(
        thrower_kernel,
        out_shape=jax.ShapeDtypeStruct((b_p, out_p), jnp.float32),
        grid=grid,
        in_specs=[pl.BlockSpec((tb, in_p), lambda i: (i, 0)),
                  const(we), const(be),
                  const(w1), const(b1),
                  const(w2), const(b2),
                  const(wd), const(bd)],
        out_specs=pl.BlockSpec((tb, out_p), lambda i: (i, 0)),
        compiler_params=pltpu.CompilerParams(
            dimension_semantics=("parallel",),
            vmem_limit_bytes=vmem_limit),
        cost_estimate=pl.CostEstimate(flops=flops,
                                      transcendentals=0,
                                      bytes_accessed=bytes_accessed),
    )(*operands)

    # Slice away batch / lane padding.
    return out[:B, :out_dim]


def init_params(key, input_dim, hidden_dim, output_dim):
    """Deterministic init mimicking torch.nn.Linear (uniform(-1/sqrt(fan_in), +))."""
    def linear(key, fan_in, fan_out):
        kw, kb = jax.random.split(key)
        bound = 1.0 / jnp.sqrt(fan_in)
        # weight stored already transposed: [fan_in, fan_out]
        w = jax.random.uniform(kw, (fan_in, fan_out), jnp.float32, -bound, bound)
        b = jax.random.uniform(kb, (1, fan_out), jnp.float32, -bound, bound)
        return w, b

    k0, k1, k2, k3 = jax.random.split(key, 4)
    we, be = linear(k0, input_dim, hidden_dim)
    w1, b1 = linear(k1, hidden_dim, hidden_dim)
    w2, b2 = linear(k2, hidden_dim, hidden_dim)
    wd, bd = linear(k3, hidden_dim, output_dim)
    return dict(we=we, be=be, w1=w1, b1=b1, w2=w2, b2=b2, wd=wd, bd=bd)


def reference_forward(x, p):
    lrelu = lambda v: jnp.where(v > 0, v, 0.01 * v)
    h = lrelu(x @ p["we"] + p["be"])
    h1 = lrelu(h @ p["w1"] + p["b1"])
    h2 = lrelu(h1 @ p["w2"] + p["b2"])
    return h2 @ p["wd"] + p["bd"]


if __name__ == "__main__":
    key = jax.random.PRNGKey(0)
    k_param, k_x = jax.random.split(key)

    batch, input_dim, hidden_dim, output_dim = 8, 16, 32, 4
    params = init_params(k_param, input_dim, hidden_dim, output_dim)
    x = jax.random.normal(k_x, (batch, input_dim), jnp.float32)

    out = thrower_forward(x, params)
    out = jax.block_until_ready(out)

    ref = reference_forward(x, params)
    assert out.shape == (batch, output_dim)
    assert jnp.allclose(out, ref, atol=1e-5, rtol=1e-5)

    print("KERNEL_OK")
</pallas_src>

<mosaic_0001>
module attributes {stable_mosaic.version = 11 : i64} {
  func.func @thrower_kernel(%arg0: i32, %arg1: memref<8x128xf32, #tpu.memory_space<vmem>>, %arg2: memref<128x128xf32, #tpu.memory_space<vmem>>, %arg3: memref<1x128xf32, #tpu.memory_space<vmem>>, %arg4: memref<128x128xf32, #tpu.memory_space<vmem>>, %arg5: memref<1x128xf32, #tpu.memory_space<vmem>>, %arg6: memref<128x128xf32, #tpu.memory_space<vmem>>, %arg7: memref<1x128xf32, #tpu.memory_space<vmem>>, %arg8: memref<128x128xf32, #tpu.memory_space<vmem>>, %arg9: memref<1x128xf32, #tpu.memory_space<vmem>>, %arg10: memref<8x128xf32, #tpu.memory_space<vmem>>) attributes {dimension_semantics = [#tpu.dimension_semantics<parallel>], iteration_bounds = array<i64: 1>, scalar_prefetch = 0 : i64, scratch_operands = 0 : i64, tpu.core_type = #tpu.core_type<tc>, window_params = [{transform_indices = @transform_0, window_bounds = array<i64: 8, 128>}, {pipeline_mode = #tpu.pipeline_mode<synchronous>, transform_indices = @transform_1, window_bounds = array<i64: 128, 128>}, {pipeline_mode = #tpu.pipeline_mode<synchronous>, transform_indices = @transform_2, window_bounds = array<i64: 1, 128>}, {pipeline_mode = #tpu.pipeline_mode<synchronous>, transform_indices = @transform_3, window_bounds = array<i64: 128, 128>}, {pipeline_mode = #tpu.pipeline_mode<synchronous>, transform_indices = @transform_4, window_bounds = array<i64: 1, 128>}, {pipeline_mode = #tpu.pipeline_mode<synchronous>, transform_indices = @transform_5, window_bounds = array<i64: 128, 128>}, {pipeline_mode = #tpu.pipeline_mode<synchronous>, transform_indices = @transform_6, window_bounds = array<i64: 1, 128>}, {pipeline_mode = #tpu.pipeline_mode<synchronous>, transform_indices = @transform_7, window_bounds = array<i64: 128, 128>}, {pipeline_mode = #tpu.pipeline_mode<synchronous>, transform_indices = @transform_8, window_bounds = array<i64: 1, 128>}, {transform_indices = @transform_9, window_bounds = array<i64: 8, 128>}]} {
    %c0 = arith.constant 0 : index
    %c0_0 = arith.constant 0 : index
    %0 = vector.load %arg1[%c0, %c0_0] : memref<8x128xf32, #tpu.memory_space<vmem>>, vector<8x128xf32>
    %c0_1 = arith.constant 0 : index
    %c0_2 = arith.constant 0 : index
    %1 = vector.load %arg2[%c0_1, %c0_2] : memref<128x128xf32, #tpu.memory_space<vmem>>, vector<128x128xf32>
    %cst = arith.constant dense<0.000000e+00> : vector<8x128xf32>
    %2 = tpu.matmul %0, %1, %cst {dimension_numbers = #tpu.dot_dimension_numbers<[1], [0], [0], [1], [0, 0, 1, 1], [], []>} : vector<8x128xf32>, vector<128x128xf32>, vector<8x128xf32> -> vector<8x128xf32>
    %c0_3 = arith.constant 0 : index
    %c0_4 = arith.constant 0 : index
    %3 = vector.load %arg3[%c0_3, %c0_4] : memref<1x128xf32, #tpu.memory_space<vmem>>, vector<1x128xf32>
    %4 = vector.broadcast %3 : vector<1x128xf32> to vector<8x128xf32>
    %5 = arith.addf %2, %4 : vector<8x128xf32>
    %cst_5 = arith.constant 0.00999999977 : f32
    %6 = vector.broadcast %cst_5 : f32 to vector<8x128xf32>
    %7 = arith.mulf %6, %5 : vector<8x128xf32>
    %8 = arith.maximumf %5, %7 : vector<8x128xf32>
    %c0_6 = arith.constant 0 : index
    %c0_7 = arith.constant 0 : index
    %9 = vector.load %arg4[%c0_6, %c0_7] : memref<128x128xf32, #tpu.memory_space<vmem>>, vector<128x128xf32>
    %cst_8 = arith.constant dense<0.000000e+00> : vector<8x128xf32>
    %10 = tpu.matmul %8, %9, %cst_8 {dimension_numbers = #tpu.dot_dimension_numbers<[1], [0], [0], [1], [0, 0, 1, 1], [], []>} : vector<8x128xf32>, vector<128x128xf32>, vector<8x128xf32> -> vector<8x128xf32>
    %c0_9 = arith.constant 0 : index
    %c0_10 = arith.constant 0 : index
    %11 = vector.load %arg5[%c0_9, %c0_10] : memref<1x128xf32, #tpu.memory_space<vmem>>, vector<1x128xf32>
    %12 = vector.broadcast %11 : vector<1x128xf32> to vector<8x128xf32>
    %13 = arith.addf %10, %12 : vector<8x128xf32>
    %cst_11 = arith.constant 0.00999999977 : f32
    %14 = vector.broadcast %cst_11 : f32 to vector<8x128xf32>
    %15 = arith.mulf %14, %13 : vector<8x128xf32>
    %16 = arith.maximumf %13, %15 : vector<8x128xf32>
    %c0_12 = arith.constant 0 : index
    %c0_13 = arith.constant 0 : index
    %17 = vector.load %arg6[%c0_12, %c0_13] : memref<128x128xf32, #tpu.memory_space<vmem>>, vector<128x128xf32>
    %cst_14 = arith.constant dense<0.000000e+00> : vector<8x128xf32>
    %18 = tpu.matmul %16, %17, %cst_14 {dimension_numbers = #tpu.dot_dimension_numbers<[1], [0], [0], [1], [0, 0, 1, 1], [], []>} : vector<8x128xf32>, vector<128x128xf32>, vector<8x128xf32> -> vector<8x128xf32>
    %c0_15 = arith.constant 0 : index
    %c0_16 = arith.constant 0 : index
    %19 = vector.load %arg7[%c0_15, %c0_16] : memref<1x128xf32, #tpu.memory_space<vmem>>, vector<1x128xf32>
    %20 = vector.broadcast %19 : vector<1x128xf32> to vector<8x128xf32>
    %21 = arith.addf %18, %20 : vector<8x128xf32>
    %cst_17 = arith.constant 0.00999999977 : f32
    %22 = vector.broadcast %cst_17 : f32 to vector<8x128xf32>
    %23 = arith.mulf %22, %21 : vector<8x128xf32>
    %24 = arith.maximumf %21, %23 : vector<8x128xf32>
    %c0_18 = arith.constant 0 : index
    %c0_19 = arith.constant 0 : index
    %25 = vector.load %arg8[%c0_18, %c0_19] : memref<128x128xf32, #tpu.memory_space<vmem>>, vector<128x128xf32>
    %cst_20 = arith.constant dense<0.000000e+00> : vector<8x128xf32>
    %26 = tpu.matmul %24, %25, %cst_20 {dimension_numbers = #tpu.dot_dimension_numbers<[1], [0], [0], [1], [0, 0, 1, 1], [], []>} : vector<8x128xf32>, vector<128x128xf32>, vector<8x128xf32> -> vector<8x128xf32>
    %c0_21 = arith.constant 0 : index
    %c0_22 = arith.constant 0 : index
    %27 = vector.load %arg9[%c0_21, %c0_22] : memref<1x128xf32, #tpu.memory_space<vmem>>, vector<1x128xf32>
    %28 = vector.broadcast %27 : vector<1x128xf32> to vector<8x128xf32>
    %29 = arith.addf %26, %28 : vector<8x128xf32>
    %c0_23 = arith.constant 0 : index
    %c0_24 = arith.constant 0 : index
    %30 = vector.load %arg10[%c0_23, %c0_24] : memref<8x128xf32, #tpu.memory_space<vmem>>, vector<8x128xf32>
    tpu.vector_store %arg10[%c0_23, %c0_24], %29 {strides = array<i32>} : memref<8x128xf32, #tpu.memory_space<vmem>>, vector<8x128xf32>,
    return
  }
  func.func @transform_0(%arg0: i32) -> (i32, i32) {
    %c0_i32 = arith.constant 0 : i32
    %c0_i32_0 = arith.constant 0 : i32
    return %arg0, %c0_i32 : i32, i32
  }
  func.func @transform_1(%arg0: i32) -> (i32, i32) {
    %c0_i32 = arith.constant 0 : i32
    %c0_i32_0 = arith.constant 0 : i32
    %c0_i32_1 = arith.constant 0 : i32
    return %c0_i32, %c0_i32_0 : i32, i32
  }
  func.func @transform_2(%arg0: i32) -> (i32, i32) {
    %c0_i32 = arith.constant 0 : i32
    %c0_i32_0 = arith.constant 0 : i32
    %c0_i32_1 = arith.constant 0 : i32
    return %c0_i32, %c0_i32_0 : i32, i32
  }
  func.func @transform_3(%arg0: i32) -> (i32, i32) {
    %c0_i32 = arith.constant 0 : i32
    %c0_i32_0 = arith.constant 0 : i32
    %c0_i32_1 = arith.constant 0 : i32
    return %c0_i32, %c0_i32_0 : i32, i32
  }
  func.func @transform_4(%arg0: i32) -> (i32, i32) {
    %c0_i32 = arith.constant 0 : i32
    %c0_i32_0 = arith.constant 0 : i32
    %c0_i32_1 = arith.constant 0 : i32
    return %c0_i32, %c0_i32_0 : i32, i32
  }
  func.func @transform_5(%arg0: i32) -> (i32, i32) {
    %c0_i32 = arith.constant 0 : i32
    %c0_i32_0 = arith.constant 0 : i32
    %c0_i32_1 = arith.constant 0 : i32
    return %c0_i32, %c0_i32_0 : i32, i32
  }
  func.func @transform_6(%arg0: i32) -> (i32, i32) {
    %c0_i32 = arith.constant 0 : i32
    %c0_i32_0 = arith.constant 0 : i32
    %c0_i32_1 = arith.constant 0 : i32
    return %c0_i32, %c0_i32_0 : i32, i32
  }
  func.func @transform_7(%arg0: i32) -> (i32, i32) {
    %c0_i32 = arith.constant 0 : i32
    %c0_i32_0 = arith.constant 0 : i32
    %c0_i32_1 = arith.constant 0 : i32
    return %c0_i32, %c0_i32_0 : i32, i32
  }
  func.func @transform_8(%arg0: i32) -> (i32, i32) {
    %c0_i32 = arith.constant 0 : i32
    %c0_i32_0 = arith.constant 0 : i32
    %c0_i32_1 = arith.constant 0 : i32
    return %c0_i32, %c0_i32_0 : i32, i32
  }
  func.func @transform_9(%arg0: i32) -> (i32, i32) {
    %c0_i32 = arith.constant 0 : i32
    %c0_i32_0 = arith.constant 0 : i32
    return %arg0, %c0_i32 : i32, i32
  }
}

</mosaic_0001>

<llo_original>
// kernel: tpu_custom_call.1
$region0: #{tpu_custom_call.1}
  #allocation0 [shape = 'u32[]', space=smem, size = 0x4, offset = 0x4, fixed_abs, tag = 'smem constant byte address 0x4 - core index']
  #allocation1 [shape = 'u32[72,128]{1,0:T(1,128)}', space=vmem, size = 0x9000, scoped, tag = 'internal scratch']
  %s0 = inlined_call_operand.hbm [shape: f32[8,128], index: 0, kind: input, shape index: {}]
  %s1 = inlined_call_operand.hbm [shape: f32[128,128], index: 1, kind: input, shape index: {}]
  %s2 = inlined_call_operand.vmem [shape: f32[1,128], index: 2, kind: input, shape index: {}]
  %s3 = inlined_call_operand.hbm [shape: f32[128,128], index: 3, kind: input, shape index: {}]
  %s4 = inlined_call_operand.vmem [shape: f32[1,128], index: 4, kind: input, shape index: {}]
  %s5 = inlined_call_operand.hbm [shape: f32[128,128], index: 5, kind: input, shape index: {}]
  %s6 = inlined_call_operand.vmem [shape: f32[1,128], index: 6, kind: input, shape index: {}]
  %s7 = inlined_call_operand.hbm [shape: f32[128,128], index: 7, kind: input, shape index: {}]
  %s8 = inlined_call_operand.vmem [shape: f32[1,128], index: 8, kind: input, shape index: {}]
  %s9 = inlined_call_operand.hbm [shape: f32[8,128], index: 9, kind: output, shape index: {}]
  %s10 = sld [smem:[#allocation0]]
  $region66: #{tpu_custom_call.1} parent=0
    _
  %s12 = ssub.s32 1, %s10
  %s13 = scalar_select 0, %s12, %s10
  $region1: #{tpu_custom_call.1} parent=0
    #allocation2 [shape = 'u8[4096]{0}', space=vmem, size = 0x1000, scoped, tag = 'input window, operand 0, single buffered']
    #allocation3 [shape = 's32[1]{0}', space=sflag, size = 0x4, scoped, tag = 'scoped memory for tpu_custom_call.1']
    #allocation4 [shape = 's32[1]{0}', space=sflag, size = 0x4, scoped, tag = 'scoped memory for tpu_custom_call.1']
    #allocation5 [shape = 'u8[65536]{0}', space=vmem, size = 0x10000, scoped, tag = 'input window, operand 1, single buffered']
    #allocation6 [shape = 's32[1]{0}', space=sflag, size = 0x4, scoped, tag = 'scoped memory for tpu_custom_call.1']
    #allocation7 [shape = 'u8[65536]{0}', space=vmem, size = 0x10000, scoped, tag = 'input window, operand 3, single buffered']
    #allocation8 [shape = 'u8[65536]{0}', space=vmem, size = 0x10000, scoped, tag = 'input window, operand 5, single buffered']
    #allocation9 [shape = 's32[1]{0}', space=sflag, size = 0x4, scoped, tag = 'scoped memory for tpu_custom_call.1']
    #allocation10 [shape = 'u8[65536]{0}', space=vmem, size = 0x10000, scoped, tag = 'input window, operand 7, single buffered']
    #allocation11 [shape = 'u8[4096]{0}', space=vmem, size = 0x1000, scoped, tag = 'output window, operand 0, single buffered']
    %14 = vsyncpa [#allocation3], 0
    %15 = vsyncpa [#allocation6], 0
    %16 = vsyncpa [#allocation9], 0
    %17 = vsyncpa [#allocation4], 0
    // Predicated region
    $region2: #{tpu_custom_call.1} parent=1 // pred_check
      _
    $region3: #{tpu_custom_call.1} parent=1 // pred_check_branch
      %19 = sbr.rel (0) target = $region5
    $region4: #{tpu_custom_call.1} parent=1 // pred_region
      %21 = vsyncadd [#allocation3], 0
      %s23 = sshll.u32 %s0, 4
      %s24 = int_to_ptr.hbm [resolvable:$true] %s23
      %s25 = sshll.u32 [#allocation2], 4
      %s26 = int_to_ptr.vmem [resolvable:$true] %s25
      %28 = dma.hbm_to_vmem [thread:$0]  %s24, 128, %s26, [#allocation3]
    $region5: #{tpu_custom_call.1} parent=1 // pred_fallthru
      _
    // Predicated region
    $region6: #{tpu_custom_call.1} parent=1 // pred_check
      _
    $region7: #{tpu_custom_call.1} parent=1 // pred_check_branch
      %30 = sbr.rel (0) target = $region9
    $region8: #{tpu_custom_call.1} parent=1 // pred_region
      %32 = vsyncadd [#allocation6], 0
      %s33 = sshll.u32 %s1, 4
      %s34 = int_to_ptr.hbm [resolvable:$true] %s33
      %s35 = sshll.u32 [#allocation5], 4
      %s36 = int_to_ptr.vmem [resolvable:$true] %s35
      %41 = dma.hbm_to_vmem [thread:$0]  %s34, 2048, %s36, [#allocation6], 128, 128, 8
    $region9: #{tpu_custom_call.1} parent=1 // pred_fallthru
      _
    // Predicated region
    $region10: #{tpu_custom_call.1} parent=1 // pred_check
      _
    $region11: #{tpu_custom_call.1} parent=1 // pred_check_branch
      %43 = sbr.rel (0) target = $region13
    $region12: #{tpu_custom_call.1} parent=1 // pred_region
      _
    $region13: #{tpu_custom_call.1} parent=1 // pred_fallthru
      _
    // Predicated region
    $region14: #{tpu_custom_call.1} parent=1 // pred_check
      _
    $region15: #{tpu_custom_call.1} parent=1 // pred_check_branch
      %45 = sbr.rel (0) target = $region17
    $region16: #{tpu_custom_call.1} parent=1 // pred_region
      %47 = vsyncadd [#allocation6], 0
      %s48 = sshll.u32 %s3, 4
      %s49 = int_to_ptr.hbm [resolvable:$true] %s48
      %s50 = sshll.u32 [#allocation7], 4
      %s51 = int_to_ptr.vmem [resolvable:$true] %s50
      %56 = dma.hbm_to_vmem [thread:$0]  %s49, 2048, %s51, [#allocation6], 128, 128, 8
    $region17: #{tpu_custom_call.1} parent=1 // pred_fallthru
      _
    // Predicated region
    $region18: #{tpu_custom_call.1} parent=1 // pred_check
      _
    $region19: #{tpu_custom_call.1} parent=1 // pred_check_branch
      %58 = sbr.rel (0) target = $region21
    $region20: #{tpu_custom_call.1} parent=1 // pred_region
      _
    $region21: #{tpu_custom_call.1} parent=1 // pred_fallthru
      _
    // Predicated region
    $region22: #{tpu_custom_call.1} parent=1 // pred_check
      _
    $region23: #{tpu_custom_call.1} parent=1 // pred_check_branch
      %60 = sbr.rel (0) target = $region25
    $region24: #{tpu_custom_call.1} parent=1 // pred_region
      %62 = vsyncadd [#allocation9], 0
      %s63 = sshll.u32 %s5, 4
      %s64 = int_to_ptr.hbm [resolvable:$true] %s63
      %s65 = sshll.u32 [#allocation8], 4
      %s66 = int_to_ptr.vmem [resolvable:$true] %s65
      %71 = dma.hbm_to_vmem [thread:$0]  %s64, 2048, %s66, [#allocation9], 128, 128, 8
    $region25: #{tpu_custom_call.1} parent=1 // pred_fallthru
      _
    // Predicated region
    $region26: #{tpu_custom_call.1} parent=1 // pred_check
      _
    $region27: #{tpu_custom_call.1} parent=1 // pred_check_branch
      %73 = sbr.rel (0) target = $region29
    $region28: #{tpu_custom_call.1} parent=1 // pred_region
      _
    $region29: #{tpu_custom_call.1} parent=1 // pred_fallthru
      _
    // Predicated region
    $region30: #{tpu_custom_call.1} parent=1 // pred_check
      _
    $region31: #{tpu_custom_call.1} parent=1 // pred_check_branch
      %75 = sbr.rel (0) target = $region33
    $region32: #{tpu_custom_call.1} parent=1 // pred_region
      %77 = vsyncadd [#allocation9], 0
      %s78 = sshll.u32 %s7, 4
      %s79 = int_to_ptr.hbm [resolvable:$true] %s78
      %s80 = sshll.u32 [#allocation10], 4
      %s81 = int_to_ptr.vmem [resolvable:$true] %s80
      %86 = dma.hbm_to_vmem [thread:$0]  %s79, 2048, %s81, [#allocation9], 128, 128, 8
    $region33: #{tpu_custom_call.1} parent=1 // pred_fallthru
      _
    // Predicated region
    $region34: #{tpu_custom_call.1} parent=1 // pred_check
      _
    $region35: #{tpu_custom_call.1} parent=1 // pred_check_branch
      %88 = sbr.rel (0) target = $region37
    $region36: #{tpu_custom_call.1} parent=1 // pred_region
      _
    $region37: #{tpu_custom_call.1} parent=1 // pred_fallthru
      _
    // Predicated region
    $region38: #{tpu_custom_call.1} parent=1 // pred_check
      _
    $region39: #{tpu_custom_call.1} parent=1 // pred_check_branch
      %90 = sbr.rel (0) target = $region41
    $region40: #{tpu_custom_call.1} parent=1 // pred_region
      %92 = dma.done [#allocation3], 128
    $region41: #{tpu_custom_call.1} parent=1 // pred_fallthru
      _
    // Predicated region
    $region42: #{tpu_custom_call.1} parent=1 // pred_check
      _
    $region43: #{tpu_custom_call.1} parent=1 // pred_check_branch
      %94 = sbr.rel (0) target = $region45
    $region44: #{tpu_custom_call.1} parent=1 // pred_region
      %96 = dma.done [#allocation6], 2048
    $region45: #{tpu_custom_call.1} parent=1 // pred_fallthru
      _
    // Predicated region
    $region46: #{tpu_custom_call.1} parent=1 // pred_check
      _
    $region47: #{tpu_custom_call.1} parent=1 // pred_check_branch
      %98 = sbr.rel (0) target = $region49
    $region48: #{tpu_custom_call.1} parent=1 // pred_region
      %100 = dma.done [#allocation6], 2048
    $region49: #{tpu_custom_call.1} parent=1 // pred_fallthru
      _
    // Predicated region
    $region50: #{tpu_custom_call.1} parent=1 // pred_check
      _
    $region51: #{tpu_custom_call.1} parent=1 // pred_check_branch
      %102 = sbr.rel (0) target = $region53
    $region52: #{tpu_custom_call.1} parent=1 // pred_region
      %104 = dma.done [#allocation9], 2048
    $region53: #{tpu_custom_call.1} parent=1 // pred_fallthru
      _
    // Predicated region
    $region54: #{tpu_custom_call.1} parent=1 // pred_check
      _
    $region55: #{tpu_custom_call.1} parent=1 // pred_check_branch
      %106 = sbr.rel (0) target = $region57
    $region56: #{tpu_custom_call.1} parent=1 // pred_region
      %108 = dma.done [#allocation9], 2048
    $region57: #{tpu_custom_call.1} parent=1 // pred_fallthru
      _
    %v109 = vld [vmem:[#allocation2] sm:$0xff]
    %v110 = vld [vmem:[#allocation5] sm:$0xff]
    %v111 = vld [vmem:[#allocation5 + $0x8] sm:$0xff]
    %v112 = vld [vmem:[#allocation5 + $0x10] sm:$0xff]
    %v113 = vld [vmem:[#allocation5 + $0x18] sm:$0xff]
    %v114 = vld [vmem:[#allocation5 + $0x20] sm:$0xff]
    %v115 = vld [vmem:[#allocation5 + $0x28] sm:$0xff]
    %v116 = vld [vmem:[#allocation5 + $0x30] sm:$0xff]
    %v117 = vld [vmem:[#allocation5 + $0x38] sm:$0xff]
    %v118 = vld [vmem:[#allocation5 + $0x40] sm:$0xff]
    %v119 = vld [vmem:[#allocation5 + $0x48] sm:$0xff]
    %v120 = vld [vmem:[#allocation5 + $0x50] sm:$0xff]
    %v121 = vld [vmem:[#allocation5 + $0x58] sm:$0xff]
    %v122 = vld [vmem:[#allocation5 + $0x60] sm:$0xff]
    %v123 = vld [vmem:[#allocation5 + $0x68] sm:$0xff]
    %v124 = vld [vmem:[#allocation5 + $0x70] sm:$0xff]
    %v125 = vld [vmem:[#allocation5 + $0x78] sm:$0xff]
    %v126 = vld [vmem:[%s2] sm:$0x1]
    %v128 = vperm.slane %v126, 0
    %130 = vmatpush.msra.mxu0 %v125
    %131 = vmatpush.msra.mxu0 %v124
    %132 = vmatpush.msra.mxu0 %v123
    %133 = vmatpush.msra.mxu0 %v122
    %134 = vmatpush.msra.mxu0 %v121
    %135 = vmatpush.msra.mxu0 %v120
    %136 = vmatpush.msra.mxu0 %v119
    %137 = vmatpush.msra.mxu0 %v118
    %138 = vmatpush.msra.mxu0 %v117
    %139 = vmatpush.msra.mxu0 %v116
    %140 = vmatpush.msra.mxu0 %v115
    %141 = vmatpush.msra.mxu0 %v114
    %142 = vmatpush.msra.mxu0 %v113
    %143 = vmatpush.msra.mxu0 %v112
    %144 = vmatpush.msra.mxu0 %v111
    %145 = vmatpush.msra.mxu0 %v110
    %146 = vmatmul.f32.gmra.mxu0 %v109
    %v147 = vpop.f32.mrf.mxu0
    %v148 = vadd.f32 %v128, %v147
    %149 = vdwg.mxu0
    %v150 = vmul.f32 %v148, 0.01
    %v151 = vmax.f32 %v148, %v150
    %v152 = vld [vmem:[#allocation7] sm:$0xff]
    %v153 = vld [vmem:[#allocation7 + $0x8] sm:$0xff]
    %v154 = vld [vmem:[#allocation7 + $0x10] sm:$0xff]
    %v155 = vld [vmem:[#allocation7 + $0x18] sm:$0xff]
    %v156 = vld [vmem:[#allocation7 + $0x20] sm:$0xff]
    %v157 = vld [vmem:[#allocation7 + $0x28] sm:$0xff]
    %v158 = vld [vmem:[#allocation7 + $0x30] sm:$0xff]
    %v159 = vld [vmem:[#allocation7 + $0x38] sm:$0xff]
    %v160 = vld [vmem:[#allocation7 + $0x40] sm:$0xff]
    %v161 = vld [vmem:[#allocation7 + $0x48] sm:$0xff]
    %v162 = vld [vmem:[#allocation7 + $0x50] sm:$0xff]
    %v163 = vld [vmem:[#allocation7 + $0x58] sm:$0xff]
    %v164 = vld [vmem:[#allocation7 + $0x60] sm:$0xff]
    %v165 = vld [vmem:[#allocation7 + $0x68] sm:$0xff]
    %v166 = vld [vmem:[#allocation7 + $0x70] sm:$0xff]
    %v167 = vld [vmem:[#allocation7 + $0x78] sm:$0xff]
    %v168 = vld [vmem:[%s4] sm:$0x1]
    %v170 = vperm.slane %v168, 0
    %172 = vmatpush.msra.mxu0 %v167
    %173 = vmatpush.msra.mxu0 %v166
    %174 = vmatpush.msra.mxu0 %v165
    %175 = vmatpush.msra.mxu0 %v164
    %176 = vmatpush.msra.mxu0 %v163
    %177 = vmatpush.msra.mxu0 %v162
    %178 = vmatpush.msra.mxu0 %v161
    %179 = vmatpush.msra.mxu0 %v160
    %180 = vmatpush.msra.mxu0 %v159
    %181 = vmatpush.msra.mxu0 %v158
    %182 = vmatpush.msra.mxu0 %v157
    %183 = vmatpush.msra.mxu0 %v156
    %184 = vmatpush.msra.mxu0 %v155
    %185 = vmatpush.msra.mxu0 %v154
    %186 = vmatpush.msra.mxu0 %v153
    %187 = vmatpush.msra.mxu0 %v152
    %188 = vmatmul.f32.gmra.mxu0 %v151
    %v189 = vpop.f32.mrf.mxu0
    %v190 = vadd.f32 %v170, %v189
    %191 = vdwg.mxu0
    %v192 = vmul.f32 %v190, 0.01
    %v193 = vmax.f32 %v190, %v192
    %v194 = vld [vmem:[#allocation8] sm:$0xff]
    %v195 = vld [vmem:[#allocation8 + $0x8] sm:$0xff]
    %v196 = vld [vmem:[#allocation8 + $0x10] sm:$0xff]
    %v197 = vld [vmem:[#allocation8 + $0x18] sm:$0xff]
    %v198 = vld [vmem:[#allocation8 + $0x20] sm:$0xff]
    %v199 = vld [vmem:[#allocation8 + $0x28] sm:$0xff]
    %v200 = vld [vmem:[#allocation8 + $0x30] sm:$0xff]
    %v201 = vld [vmem:[#allocation8 + $0x38] sm:$0xff]
    %v202 = vld [vmem:[#allocation8 + $0x40] sm:$0xff]
    %v203 = vld [vmem:[#allocation8 + $0x48] sm:$0xff]
    %v204 = vld [vmem:[#allocation8 + $0x50] sm:$0xff]
    %v205 = vld [vmem:[#allocation8 + $0x58] sm:$0xff]
    %v206 = vld [vmem:[#allocation8 + $0x60] sm:$0xff]
    %v207 = vld [vmem:[#allocation8 + $0x68] sm:$0xff]
    %v208 = vld [vmem:[#allocation8 + $0x70] sm:$0xff]
    %v209 = vld [vmem:[#allocation8 + $0x78] sm:$0xff]
    %v210 = vld [vmem:[%s6] sm:$0x1]
    %v212 = vperm.slane %v210, 0
    %214 = vmatpush.msra.mxu0 %v209
    %215 = vmatpush.msra.mxu0 %v208
    %216 = vmatpush.msra.mxu0 %v207
    %217 = vmatpush.msra.mxu0 %v206
    %218 = vmatpush.msra.mxu0 %v205
    %219 = vmatpush.msra.mxu0 %v204
    %220 = vmatpush.msra.mxu0 %v203
    %221 = vmatpush.msra.mxu0 %v202
    %222 = vmatpush.msra.mxu0 %v201
    %223 = vmatpush.msra.mxu0 %v200
    %224 = vmatpush.msra.mxu0 %v199
    %225 = vmatpush.msra.mxu0 %v198
    %226 = vmatpush.msra.mxu0 %v197
    %227 = vmatpush.msra.mxu0 %v196
    %228 = vmatpush.msra.mxu0 %v195
    %229 = vmatpush.msra.mxu0 %v194
    %230 = vmatmul.f32.gmra.mxu0 %v193
    %v231 = vpop.f32.mrf.mxu0
    %v232 = vadd.f32 %v212, %v231
    %233 = vdwg.mxu0
    %v234 = vmul.f32 %v232, 0.01
    %v235 = vmax.f32 %v232, %v234
    %v236 = vld [vmem:[#allocation10] sm:$0xff]
    %v237 = vld [vmem:[#allocation10 + $0x8] sm:$0xff]
    %v238 = vld [vmem:[#allocation10 + $0x10] sm:$0xff]
    %v239 = vld [vmem:[#allocation10 + $0x18] sm:$0xff]
    %v240 = vld [vmem:[#allocation10 + $0x20] sm:$0xff]
    %v241 = vld [vmem:[#allocation10 + $0x28] sm:$0xff]
    %v242 = vld [vmem:[#allocation10 + $0x30] sm:$0xff]
    %v243 = vld [vmem:[#allocation10 + $0x38] sm:$0xff]
    %v244 = vld [vmem:[#allocation10 + $0x40] sm:$0xff]
    %v245 = vld [vmem:[#allocation10 + $0x48] sm:$0xff]
    %v246 = vld [vmem:[#allocation10 + $0x50] sm:$0xff]
    %v247 = vld [vmem:[#allocation10 + $0x58] sm:$0xff]
    %v248 = vld [vmem:[#allocation10 + $0x60] sm:$0xff]
    %v249 = vld [vmem:[#allocation10 + $0x68] sm:$0xff]
    %v250 = vld [vmem:[#allocation10 + $0x70] sm:$0xff]
    %v251 = vld [vmem:[#allocation10 + $0x78] sm:$0xff]
    %v252 = vld [vmem:[%s8] sm:$0x1]
    %v254 = vperm.slane %v252, 0
    %256 = vmatpush.msra.mxu0 %v251
    %257 = vmatpush.msra.mxu0 %v250
    %258 = vmatpush.msra.mxu0 %v249
    %259 = vmatpush.msra.mxu0 %v248
    %260 = vmatpush.msra.mxu0 %v247
    %261 = vmatpush.msra.mxu0 %v246
    %262 = vmatpush.msra.mxu0 %v245
    %263 = vmatpush.msra.mxu0 %v244
    %264 = vmatpush.msra.mxu0 %v243
    %265 = vmatpush.msra.mxu0 %v242
    %266 = vmatpush.msra.mxu0 %v241
    %267 = vmatpush.msra.mxu0 %v240
    %268 = vmatpush.msra.mxu0 %v239
    %269 = vmatpush.msra.mxu0 %v238
    %270 = vmatpush.msra.mxu0 %v237
    %271 = vmatpush.msra.mxu0 %v236
    %272 = vmatmul.f32.gmra.mxu0 %v235
    %v273 = vpop.f32.mrf.mxu0
    %v274 = vadd.f32 %v254, %v273
    %275 = vdwg.mxu0
    %276 = vst [vmem:[#allocation11] sm:$0xff] %v274
    // Predicated region
    $region58: #{tpu_custom_call.1} parent=1 // pred_check
      _
    $region59: #{tpu_custom_call.1} parent=1 // pred_check_branch
      %278 = sbr.rel (0) target = $region61
    $region60: #{tpu_custom_call.1} parent=1 // pred_region
      %280 = vsyncadd [#allocation4], 0
      %s282 = sshll.u32 [#allocation11], 4
      %s283 = int_to_ptr.vmem [resolvable:$true] %s282
      %s284 = sshll.u32 %s9, 4
      %s285 = int_to_ptr.hbm [resolvable:$true] %s284
      %287 = dma.vmem_to_hbm [thread:$0]  %s283, 128, %s285, [#allocation4]
    $region61: #{tpu_custom_call.1} parent=1 // pred_fallthru
      _
    // Predicated region
    $region62: #{tpu_custom_call.1} parent=1 // pred_check
      _
    $region63: #{tpu_custom_call.1} parent=1 // pred_check_branch
      %289 = sbr.rel (0) target = $region65
    $region64: #{tpu_custom_call.1} parent=1 // pred_region
      %291 = dma.done [#allocation4], 128
    $region65: #{tpu_custom_call.1} parent=1 // pred_fallthru
      _
    %292 = vsyncpa [#allocation3], 1
    %293 = vsyncpa [#allocation6], 1
    %294 = vsyncpa [#allocation9], 1
    %295 = vsyncpa [#allocation4], 1

</llo_original>
